<compile_context>
chip_gen: v5e
topology: v5e:2x2
jax: 0.10.0
libtpu: 0.0.40
codegen_flags: <defaults>
</compile_context>

<pallas_src>
import jax
import jax.numpy as jnp
from jax.experimental import pallas as pl
from jax.experimental.pallas import tpu as pltpu


LOG_SIG_MIN, LOG_SIG_MAX = -20.0, 2.0


def _policy_kernel(s_ref, g_ref, w1s_ref, w1g_ref, b1_ref,
                   w2_ref, b2_ref, wh_ref, bh_ref, out_ref):
    cdt = w2_ref.dtype  # compute (MXU input) dtype: bfloat16

    s = s_ref[...].astype(cdt)
    g = g_ref[...].astype(cdt)

    # fc[0]: Linear(2*state_dim -> H0) + ReLU.
    # concat([state, goal], -1) @ W1 is computed as s @ W1[:Sd] + g @ W1[Sd:],
    # so the wrapper never materializes the concatenated input in HBM.
    h = (jnp.dot(s, w1s_ref[...], preferred_element_type=jnp.float32)
         + jnp.dot(g, w1g_ref[...], preferred_element_type=jnp.float32)
         + b1_ref[...])
    h = jnp.maximum(h, 0.0).astype(cdt)

    # fc[1]: Linear(H0 -> H1) + ReLU
    h = jnp.dot(h, w2_ref[...], preferred_element_type=jnp.float32) + b2_ref[...]
    h = jnp.maximum(h, 0.0).astype(cdt)

    # Fused heads: one (H1, 2A) matmul. Columns [:A] = mean, [A:] = log_std.
    head = jnp.dot(h, wh_ref[...], preferred_element_type=jnp.float32) + bh_ref[...]

    a = out_ref.shape[-1] // 2
    col = jax.lax.broadcasted_iota(jnp.int32, head.shape, 1)
    std = jnp.exp(jnp.clip(head, LOG_SIG_MIN, LOG_SIG_MAX))  # only used where col >= A
    out_ref[...] = jnp.where(col < a, head, std).astype(out_ref.dtype)


def prepare_params(torch_params, state_dim, compute_dtype=jnp.bfloat16):
    """One-time repack of PyTorch-layout params ((out, in) weights) into the
    kernel layout: (in, out) weights, split first layer, fused heads, bf16."""
    p = torch_params
    w1 = jnp.asarray(p["w1"]).T.astype(compute_dtype)          # (2*Sd, H0)
    return dict(
        w1s=w1[:state_dim],                                    # (Sd, H0)
        w1g=w1[state_dim:],                                    # (Sd, H0)
        b1=jnp.asarray(p["b1"], jnp.float32)[None, :],         # (1, H0)
        w2=jnp.asarray(p["w2"]).T.astype(compute_dtype),       # (H0, H1)
        b2=jnp.asarray(p["b2"], jnp.float32)[None, :],         # (1, H1)
        wh=jnp.concatenate([jnp.asarray(p["wm"]).T,
                            jnp.asarray(p["ws"]).T],
                           axis=1).astype(compute_dtype),      # (H1, 2A)
        bh=jnp.concatenate([jnp.asarray(p["bm"]),
                            jnp.asarray(p["bs"])]
                           ).astype(jnp.float32)[None, :],     # (1, 2A)
    )


def gaussian_policy_forward(state, goal, kparams, *, batch_block=256):
    """Returns (mean, std) of the Normal distribution produced by forward()."""
    B, Sd = state.shape
    H0 = kparams["b1"].shape[-1]
    H1 = kparams["b2"].shape[-1]
    two_a = kparams["bh"].shape[-1]
    A = two_a // 2

    # Batch tiling: single block for small B; otherwise 256-row tiles (MXU-sized
    # M on v6e/v7x, 2x128 on v5e) with zero-padding to a multiple of the tile.
    if B <= batch_block:
        tb, Bp = B, B
        s_in, g_in = state, goal
    else:
        tb = batch_block
        Bp = pl.cdiv(B, tb) * tb
        pad = Bp - B
        s_in = jnp.pad(state, ((0, pad), (0, 0))) if pad else state
        g_in = jnp.pad(goal, ((0, pad), (0, 0))) if pad else goal

    def full(shape):
        return pl.BlockSpec(shape, lambda i: (0,) * len(shape))

    out = pl.pallas_call(
        _policy_kernel,
        out_shape=jax.ShapeDtypeStruct((Bp, two_a), jnp.float32),
        grid=(Bp // tb,),
        in_specs=[
            pl.BlockSpec((tb, Sd), lambda i: (i, 0)),   # state tile
            pl.BlockSpec((tb, Sd), lambda i: (i, 0)),   # goal tile
            full((Sd, H0)),                             # w1 (state half)
            full((Sd, H0)),                             # w1 (goal half)
            full((1, H0)),                              # b1
            full((H0, H1)),                             # w2
            full((1, H1)),                              # b2
            full((H1, two_a)),                          # fused head weight
            full((1, two_a)),                           # fused head bias
        ],
        out_specs=pl.BlockSpec((tb, two_a), lambda i: (i, 0)),
        compiler_params=pltpu.CompilerParams(
            dimension_semantics=("parallel",),          # megacore split on v7x
        ),
    )(s_in, g_in, kparams["w1s"], kparams["w1g"], kparams["b1"],
      kparams["w2"], kparams["b2"], kparams["wh"], kparams["bh"])

    mean = out[:B, :A]
    std = out[:B, A:]
    return mean, std


def init_params(key, state_dim, action_dim, hidden_dims=(256, 256)):
    """Deterministic PyTorch-style uniform(-1/sqrt(fan_in), 1/sqrt(fan_in)) init,
    stored in PyTorch (out, in) layout."""
    def linear(key, fan_in, fan_out):
        kw, kb = jax.random.split(key)
        bound = 1.0 / jnp.sqrt(jnp.float32(fan_in))
        w = jax.random.uniform(kw, (fan_out, fan_in), jnp.float32, -bound, bound)
        b = jax.random.uniform(kb, (fan_out,), jnp.float32, -bound, bound)
        return w, b

    k1, k2, k3, k4 = jax.random.split(key, 4)
    w1, b1 = linear(k1, 2 * state_dim, hidden_dims[0])
    w2, b2 = linear(k2, hidden_dims[0], hidden_dims[1])
    wm, bm = linear(k3, hidden_dims[1], action_dim)
    ws, bs = linear(k4, hidden_dims[1], action_dim)
    return dict(w1=w1, b1=b1, w2=w2, b2=b2, wm=wm, bm=bm, ws=ws, bs=bs)


def _reference_bf16(state, goal, kparams):
    """Pure-JAX reference using the exact same bf16 weights / cast points."""
    cdt = kparams["w2"].dtype
    h = (jnp.dot(state.astype(cdt), kparams["w1s"], preferred_element_type=jnp.float32)
         + jnp.dot(goal.astype(cdt), kparams["w1g"], preferred_element_type=jnp.float32)
         + kparams["b1"])
    h = jnp.maximum(h, 0.0).astype(cdt)
    h = jnp.dot(h, kparams["w2"], preferred_element_type=jnp.float32) + kparams["b2"]
    h = jnp.maximum(h, 0.0).astype(cdt)
    head = jnp.dot(h, kparams["wh"], preferred_element_type=jnp.float32) + kparams["bh"]
    A = head.shape[-1] // 2
    mean = head[:, :A]
    std = jnp.exp(jnp.clip(head[:, A:], LOG_SIG_MIN, LOG_SIG_MAX))
    return mean, std


def _reference_f32(state, goal, torch_params):
    """Full-precision reference in the original PyTorch layout."""
    p = torch_params
    x = jnp.concatenate([state, goal], axis=-1)
    h = jnp.maximum(x @ p["w1"].T + p["b1"], 0.0)
    h = jnp.maximum(h @ p["w2"].T + p["b2"], 0.0)
    mean = h @ p["wm"].T + p["bm"]
    log_std = h @ p["ws"].T + p["bs"]
    return mean, jnp.exp(jnp.clip(log_std, LOG_SIG_MIN, LOG_SIG_MAX))


if __name__ == "__main__":
    state_dim, action_dim, batch = 16, 8, 2
    key = jax.random.PRNGKey(0)
    kp, ks, kg = jax.random.split(key, 3)

    torch_params = init_params(kp, state_dim, action_dim)   # PyTorch (out, in) layout
    kparams = prepare_params(torch_params, state_dim)       # one-time repack (no per-call transposes)

    state = jax.random.normal(ks, (batch, state_dim), jnp.float32)
    goal = jax.random.normal(kg, (batch, state_dim), jnp.float32)

    mean, std = gaussian_policy_forward(state, goal, kparams)
    jax.block_until_ready((mean, std))

    # Tight check against a reference that uses the same bf16 weights.
    ref_mean, ref_std = _reference_bf16(state, goal, kparams)
    assert jnp.allclose(mean, ref_mean, atol=2e-2, rtol=2e-2)
    assert jnp.allclose(std, ref_std, atol=2e-2, rtol=2e-2)

    # Loose sanity check against full-f32 math (bf16 weights => relaxed tolerance).
    f32_mean, f32_std = _reference_f32(state, goal, torch_params)
    assert jnp.allclose(mean, f32_mean, atol=1e-1, rtol=1e-1)
    assert jnp.allclose(std, f32_std, atol=1e-1, rtol=1e-1)

    print("KERNEL_OK")
</pallas_src>

<mosaic_0001>
module attributes {stable_mosaic.version = 11 : i64} {
  func.func @_policy_kernel(%arg0: i32, %arg1: memref<2x16xf32, #tpu.memory_space<vmem>>, %arg2: memref<2x16xf32, #tpu.memory_space<vmem>>, %arg3: memref<16x256xbf16, #tpu.memory_space<vmem>>, %arg4: memref<16x256xbf16, #tpu.memory_space<vmem>>, %arg5: memref<1x256xf32, #tpu.memory_space<vmem>>, %arg6: memref<256x256xbf16, #tpu.memory_space<vmem>>, %arg7: memref<1x256xf32, #tpu.memory_space<vmem>>, %arg8: memref<256x16xbf16, #tpu.memory_space<vmem>>, %arg9: memref<1x16xf32, #tpu.memory_space<vmem>>, %arg10: memref<2x16xf32, #tpu.memory_space<vmem>>) attributes {dimension_semantics = [#tpu.dimension_semantics<parallel>], iteration_bounds = array<i64: 1>, scalar_prefetch = 0 : i64, scratch_operands = 0 : i64, tpu.core_type = #tpu.core_type<tc>, window_params = [{transform_indices = @transform_0, window_bounds = array<i64: 2, 16>}, {transform_indices = @transform_1, window_bounds = array<i64: 2, 16>}, {pipeline_mode = #tpu.pipeline_mode<synchronous>, transform_indices = @transform_2, window_bounds = array<i64: 16, 256>}, {pipeline_mode = #tpu.pipeline_mode<synchronous>, transform_indices = @transform_3, window_bounds = array<i64: 16, 256>}, {pipeline_mode = #tpu.pipeline_mode<synchronous>, transform_indices = @transform_4, window_bounds = array<i64: 1, 256>}, {pipeline_mode = #tpu.pipeline_mode<synchronous>, transform_indices = @transform_5, window_bounds = array<i64: 256, 256>}, {pipeline_mode = #tpu.pipeline_mode<synchronous>, transform_indices = @transform_6, window_bounds = array<i64: 1, 256>}, {pipeline_mode = #tpu.pipeline_mode<synchronous>, transform_indices = @transform_7, window_bounds = array<i64: 256, 16>}, {pipeline_mode = #tpu.pipeline_mode<synchronous>, transform_indices = @transform_8, window_bounds = array<i64: 1, 16>}, {transform_indices = @transform_9, window_bounds = array<i64: 2, 16>}]} {
    %c0 = arith.constant 0 : index
    %c0_0 = arith.constant 0 : index
    %0 = vector.load %arg1[%c0, %c0_0] : memref<2x16xf32, #tpu.memory_space<vmem>>, vector<2x16xf32>
    %1 = arith.truncf %0 : vector<2x16xf32> to vector<2x16xbf16>
    %c0_1 = arith.constant 0 : index
    %c0_2 = arith.constant 0 : index
    %2 = vector.load %arg2[%c0_1, %c0_2] : memref<2x16xf32, #tpu.memory_space<vmem>>, vector<2x16xf32>
    %3 = arith.truncf %2 : vector<2x16xf32> to vector<2x16xbf16>
    %c0_3 = arith.constant 0 : index
    %c0_4 = arith.constant 0 : index
    %4 = vector.load %arg3[%c0_3, %c0_4] : memref<16x256xbf16, #tpu.memory_space<vmem>>, vector<16x256xbf16>
    %cst = arith.constant dense<0.000000e+00> : vector<2x256xf32>
    %5 = tpu.matmul %1, %4, %cst {dimension_numbers = #tpu.dot_dimension_numbers<[1], [0], [0], [1], [0, 0, 1, 1], [], []>} : vector<2x16xbf16>, vector<16x256xbf16>, vector<2x256xf32> -> vector<2x256xf32>
    %c0_5 = arith.constant 0 : index
    %c0_6 = arith.constant 0 : index
    %6 = vector.load %arg4[%c0_5, %c0_6] : memref<16x256xbf16, #tpu.memory_space<vmem>>, vector<16x256xbf16>
    %cst_7 = arith.constant dense<0.000000e+00> : vector<2x256xf32>
    %7 = tpu.matmul %3, %6, %cst_7 {dimension_numbers = #tpu.dot_dimension_numbers<[1], [0], [0], [1], [0, 0, 1, 1], [], []>} : vector<2x16xbf16>, vector<16x256xbf16>, vector<2x256xf32> -> vector<2x256xf32>
    %8 = arith.addf %5, %7 : vector<2x256xf32>
    %c0_8 = arith.constant 0 : index
    %c0_9 = arith.constant 0 : index
    %9 = vector.load %arg5[%c0_8, %c0_9] : memref<1x256xf32, #tpu.memory_space<vmem>>, vector<1x256xf32>
    %10 = vector.broadcast %9 : vector<1x256xf32> to vector<2x256xf32>
    %11 = arith.addf %8, %10 : vector<2x256xf32>
    %cst_10 = arith.constant 0.000000e+00 : f32
    %12 = vector.broadcast %cst_10 : f32 to vector<2x256xf32>
    %13 = arith.maximumf %11, %12 : vector<2x256xf32>
    %14 = arith.truncf %13 : vector<2x256xf32> to vector<2x256xbf16>
    %c0_11 = arith.constant 0 : index
    %c0_12 = arith.constant 0 : index
    %15 = vector.load %arg6[%c0_11, %c0_12] : memref<256x256xbf16, #tpu.memory_space<vmem>>, vector<256x256xbf16>
    %cst_13 = arith.constant dense<0.000000e+00> : vector<2x256xf32>
    %16 = tpu.matmul %14, %15, %cst_13 {dimension_numbers = #tpu.dot_dimension_numbers<[1], [0], [0], [1], [0, 0, 1, 1], [], []>} : vector<2x256xbf16>, vector<256x256xbf16>, vector<2x256xf32> -> vector<2x256xf32>
    %c0_14 = arith.constant 0 : index
    %c0_15 = arith.constant 0 : index
    %17 = vector.load %arg7[%c0_14, %c0_15] : memref<1x256xf32, #tpu.memory_space<vmem>>, vector<1x256xf32>
    %18 = vector.broadcast %17 : vector<1x256xf32> to vector<2x256xf32>
    %19 = arith.addf %16, %18 : vector<2x256xf32>
    %cst_16 = arith.constant 0.000000e+00 : f32
    %20 = vector.broadcast %cst_16 : f32 to vector<2x256xf32>
    %21 = arith.maximumf %19, %20 : vector<2x256xf32>
    %22 = arith.truncf %21 : vector<2x256xf32> to vector<2x256xbf16>
    %c0_17 = arith.constant 0 : index
    %c0_18 = arith.constant 0 : index
    %23 = vector.load %arg8[%c0_17, %c0_18] : memref<256x16xbf16, #tpu.memory_space<vmem>>, vector<256x16xbf16>
    %cst_19 = arith.constant dense<0.000000e+00> : vector<2x16xf32>
    %24 = tpu.matmul %22, %23, %cst_19 {dimension_numbers = #tpu.dot_dimension_numbers<[1], [0], [0], [1], [0, 0, 1, 1], [], []>} : vector<2x256xbf16>, vector<256x16xbf16>, vector<2x16xf32> -> vector<2x16xf32>
    %c0_20 = arith.constant 0 : index
    %c0_21 = arith.constant 0 : index
    %25 = vector.load %arg9[%c0_20, %c0_21] : memref<1x16xf32, #tpu.memory_space<vmem>>, vector<1x16xf32>
    %26 = vector.broadcast %25 : vector<1x16xf32> to vector<2x16xf32>
    %27 = arith.addf %24, %26 : vector<2x16xf32>
    %28 = tpu.iota {dimensions = array<i32: 1>} : vector<2x16xi32>
    %cst_22 = arith.constant -2.000000e+01 : f32
    %cst_23 = arith.constant 2.000000e+00 : f32
    %29 = vector.broadcast %cst_22 : f32 to vector<2x16xf32>
    %30 = arith.maximumf %29, %27 : vector<2x16xf32>
    %31 = vector.broadcast %cst_23 : f32 to vector<2x16xf32>
    %32 = arith.minimumf %31, %30 : vector<2x16xf32>
    %33 = math.exp %32 : vector<2x16xf32>
    %c8_i32 = arith.constant 8 : i32
    %34 = vector.broadcast %c8_i32 : i32 to vector<2x16xi32>
    %35 = arith.cmpi slt, %28, %34 : vector<2x16xi32>
    %36 = arith.select %35, %27, %33 : vector<2x16xi1>, vector<2x16xf32>
    %c0_24 = arith.constant 0 : index
    %c0_25 = arith.constant 0 : index
    %37 = vector.load %arg10[%c0_24, %c0_25] : memref<2x16xf32, #tpu.memory_space<vmem>>, vector<2x16xf32>
    tpu.vector_store %arg10[%c0_24, %c0_25], %36 {strides = array<i32>} : memref<2x16xf32, #tpu.memory_space<vmem>>, vector<2x16xf32>,
    return
  }
  func.func @transform_0(%arg0: i32) -> (i32, i32) {
    %c0_i32 = arith.constant 0 : i32
    %c0_i32_0 = arith.constant 0 : i32
    return %arg0, %c0_i32 : i32, i32
  }
  func.func @transform_1(%arg0: i32) -> (i32, i32) {
    %c0_i32 = arith.constant 0 : i32
    %c0_i32_0 = arith.constant 0 : i32
    return %arg0, %c0_i32 : i32, i32
  }
  func.func @transform_2(%arg0: i32) -> (i32, i32) {
    %c0_i32 = arith.constant 0 : i32
    %c0_i32_0 = arith.constant 0 : i32
    %c0_i32_1 = arith.constant 0 : i32
    return %c0_i32, %c0_i32_0 : i32, i32
  }
  func.func @transform_3(%arg0: i32) -> (i32, i32) {
    %c0_i32 = arith.constant 0 : i32
    %c0_i32_0 = arith.constant 0 : i32
    %c0_i32_1 = arith.constant 0 : i32
    return %c0_i32, %c0_i32_0 : i32, i32
  }
  func.func @transform_4(%arg0: i32) -> (i32, i32) {
    %c0_i32 = arith.constant 0 : i32
    %c0_i32_0 = arith.constant 0 : i32
    %c0_i32_1 = arith.constant 0 : i32
    return %c0_i32, %c0_i32_0 : i32, i32
  }
  func.func @transform_5(%arg0: i32) -> (i32, i32) {
    %c0_i32 = arith.constant 0 : i32
    %c0_i32_0 = arith.constant 0 : i32
    %c0_i32_1 = arith.constant 0 : i32
    return %c0_i32, %c0_i32_0 : i32, i32
  }
  func.func @transform_6(%arg0: i32) -> (i32, i32) {
    %c0_i32 = arith.constant 0 : i32
    %c0_i32_0 = arith.constant 0 : i32
    %c0_i32_1 = arith.constant 0 : i32
    return %c0_i32, %c0_i32_0 : i32, i32
  }
  func.func @transform_7(%arg0: i32) -> (i32, i32) {
    %c0_i32 = arith.constant 0 : i32
    %c0_i32_0 = arith.constant 0 : i32
    %c0_i32_1 = arith.constant 0 : i32
    return %c0_i32, %c0_i32_0 : i32, i32
  }
  func.func @transform_8(%arg0: i32) -> (i32, i32) {
    %c0_i32 = arith.constant 0 : i32
    %c0_i32_0 = arith.constant 0 : i32
    %c0_i32_1 = arith.constant 0 : i32
    return %c0_i32, %c0_i32_0 : i32, i32
  }
  func.func @transform_9(%arg0: i32) -> (i32, i32) {
    %c0_i32 = arith.constant 0 : i32
    %c0_i32_0 = arith.constant 0 : i32
    return %arg0, %c0_i32 : i32, i32
  }
}

</mosaic_0001>

<llo_original>
// kernel: tpu_custom_call.1
$region0: #{tpu_custom_call.1}
  #allocation0 [shape = 'u32[]', space=smem, size = 0x4, offset = 0x4, fixed_abs, tag = 'smem constant byte address 0x4 - core index']
  #allocation1 [shape = 'u32[72,128]{1,0:T(1,128)}', space=vmem, size = 0x9000, scoped, tag = 'internal scratch']
  %s0 = inlined_call_operand.vmem [shape: f32[2,16], index: 0, kind: input, shape index: {}]
  %s1 = inlined_call_operand.vmem [shape: f32[2,16], index: 1, kind: input, shape index: {}]
  %s2 = inlined_call_operand.vmem [shape: bf16[16,256], index: 2, kind: input, shape index: {}]
  %s3 = inlined_call_operand.vmem [shape: bf16[16,256], index: 3, kind: input, shape index: {}]
  %s4 = inlined_call_operand.vmem [shape: f32[1,256], index: 4, kind: input, shape index: {}]
  %s5 = inlined_call_operand.hbm [shape: bf16[256,256], index: 5, kind: input, shape index: {}]
  %s6 = inlined_call_operand.vmem [shape: f32[1,256], index: 6, kind: input, shape index: {}]
  %s7 = inlined_call_operand.vmem [shape: bf16[256,16], index: 7, kind: input, shape index: {}]
  %s8 = inlined_call_operand.vmem [shape: f32[1,16], index: 8, kind: input, shape index: {}]
  %s9 = inlined_call_operand.hbm [shape: f32[2,16], index: 9, kind: output, shape index: {}]
  %s10 = sld [smem:[#allocation0]]
  $region50: #{tpu_custom_call.1} parent=0
    _
  %s12 = ssub.s32 1, %s10
  %s13 = scalar_select 0, %s12, %s10
  $region1: #{tpu_custom_call.1} parent=0
    #allocation2 [shape = 'u8[131072]{0}', space=vmem, size = 0x20000, scoped, tag = 'input window, operand 5, single buffered']
    #allocation3 [shape = 's32[1]{0}', space=sflag, size = 0x4, scoped, tag = 'scoped memory for tpu_custom_call.1']
    #allocation4 [shape = 's32[1]{0}', space=sflag, size = 0x4, scoped, tag = 'scoped memory for tpu_custom_call.1']
    #allocation5 [shape = 'u8[1024]{0}', space=vmem, size = 0x400, scoped, tag = 'output window, operand 0, single buffered']
    %14 = vsyncpa [#allocation3], 0
    %15 = vsyncpa [#allocation4], 0
    // Predicated region
    $region2: #{tpu_custom_call.1} parent=1 // pred_check
      _
    $region3: #{tpu_custom_call.1} parent=1 // pred_check_branch
      %17 = sbr.rel (0) target = $region5
    $region4: #{tpu_custom_call.1} parent=1 // pred_region
      _
    $region5: #{tpu_custom_call.1} parent=1 // pred_fallthru
      _
    // Predicated region
    $region6: #{tpu_custom_call.1} parent=1 // pred_check
      _
    $region7: #{tpu_custom_call.1} parent=1 // pred_check_branch
      %19 = sbr.rel (0) target = $region9
    $region8: #{tpu_custom_call.1} parent=1 // pred_region
      _
    $region9: #{tpu_custom_call.1} parent=1 // pred_fallthru
      _
    // Predicated region
    $region10: #{tpu_custom_call.1} parent=1 // pred_check
      _
    $region11: #{tpu_custom_call.1} parent=1 // pred_check_branch
      %21 = sbr.rel (0) target = $region13
    $region12: #{tpu_custom_call.1} parent=1 // pred_region
      _
    $region13: #{tpu_custom_call.1} parent=1 // pred_fallthru
      _
    // Predicated region
    $region14: #{tpu_custom_call.1} parent=1 // pred_check
      _
    $region15: #{tpu_custom_call.1} parent=1 // pred_check_branch
      %23 = sbr.rel (0) target = $region17
    $region16: #{tpu_custom_call.1} parent=1 // pred_region
      _
    $region17: #{tpu_custom_call.1} parent=1 // pred_fallthru
      _
    // Predicated region
    $region18: #{tpu_custom_call.1} parent=1 // pred_check
      _
    $region19: #{tpu_custom_call.1} parent=1 // pred_check_branch
      %25 = sbr.rel (0) target = $region21
    $region20: #{tpu_custom_call.1} parent=1 // pred_region
      _
    $region21: #{tpu_custom_call.1} parent=1 // pred_fallthru
      _
    // Predicated region
    $region22: #{tpu_custom_call.1} parent=1 // pred_check
      _
    $region23: #{tpu_custom_call.1} parent=1 // pred_check_branch
      %27 = sbr.rel (0) target = $region25
    $region24: #{tpu_custom_call.1} parent=1 // pred_region
      %29 = vsyncadd [#allocation3], 0
      %s30 = sshll.u32 %s5, 4
      %s31 = int_to_ptr.hbm [resolvable:$true] %s30
      %s32 = sshll.u32 [#allocation2], 4
      %s33 = int_to_ptr.vmem [resolvable:$true] %s32
      %38 = dma.hbm_to_vmem [thread:$0]  %s31, 4096, %s33, [#allocation3], 128, 128, 8
    $region25: #{tpu_custom_call.1} parent=1 // pred_fallthru
      _
    // Predicated region
    $region26: #{tpu_custom_call.1} parent=1 // pred_check
      _
    $region27: #{tpu_custom_call.1} parent=1 // pred_check_branch
      %40 = sbr.rel (0) target = $region29
    $region28: #{tpu_custom_call.1} parent=1 // pred_region
      _
    $region29: #{tpu_custom_call.1} parent=1 // pred_fallthru
      _
    // Predicated region
    $region30: #{tpu_custom_call.1} parent=1 // pred_check
      _
    $region31: #{tpu_custom_call.1} parent=1 // pred_check_branch
      %42 = sbr.rel (0) target = $region33
    $region32: #{tpu_custom_call.1} parent=1 // pred_region
      _
    $region33: #{tpu_custom_call.1} parent=1 // pred_fallthru
      _
    // Predicated region
    $region34: #{tpu_custom_call.1} parent=1 // pred_check
      _
    $region35: #{tpu_custom_call.1} parent=1 // pred_check_branch
      %44 = sbr.rel (0) target = $region37
    $region36: #{tpu_custom_call.1} parent=1 // pred_region
      _
    $region37: #{tpu_custom_call.1} parent=1 // pred_fallthru
      _
    // Predicated region
    $region38: #{tpu_custom_call.1} parent=1 // pred_check
      _
    $region39: #{tpu_custom_call.1} parent=1 // pred_check_branch
      %46 = sbr.rel (0) target = $region41
    $region40: #{tpu_custom_call.1} parent=1 // pred_region
      %48 = dma.done [#allocation3], 4096
    $region41: #{tpu_custom_call.1} parent=1 // pred_fallthru
      _
    %v50 = vld [vmem:[%s0] sm:$0x3]
    %v51 = vpack.c.bf16 %v50, %v50
    %v52 = vld [vmem:[%s1] sm:$0x3]
    %v53 = vpack.c.bf16 %v52, %v52
    %v54 = vld [vmem:[%s2] sm:$0xff]
    %v55 = vld [vmem:[%s2 + $0x8] sm:$0xff]
    %v56 = vld [vmem:[%s3] sm:$0xff]
    %v57 = vld [vmem:[%s3 + $0x8] sm:$0xff]
    %v60 = vunpack.c.l.b16 %v56
    %v61 = vunpack.c.h.b16 %v56
    %v62 = vunpack.c.l.b16 %v57
    %v63 = vunpack.c.h.b16 %v57
    %v64 = vpack.c.b16 %v62, %v60
    %v65 = vpack.c.b16 %v63, %v61
    %vm68 = vcmask 130048
    %v70 = vsel %vm68, %v53, 0
    %72 = vmatpush.bf16.msra.mxu0 0
    %73 = vmatpush.bf16.msra.mxu0 0
    %74 = vmatpush.bf16.msra.mxu0 0
    %75 = vmatpush.bf16.msra.mxu0 0
    %76 = vmatpush.bf16.msra.mxu0 0
    %77 = vmatpush.bf16.msra.mxu0 0
    %78 = vmatpush.bf16.msra.mxu0 0
    %79 = vmatpush.bf16.msra.mxu0 %v64
    %80 = vmatmul.bf16.gmra.mxu0 %v70
    %v81 = vpop.f32.mrf.mxu0
    %v82 = vadd.f32 0.0, %v81
    %v83 = vpop.f32.mrf.mxu0
    %84 = vdwg.mxu0
    %85 = vmatpush.bf16.msra.mxu0 0
    %86 = vmatpush.bf16.msra.mxu0 0
    %87 = vmatpush.bf16.msra.mxu0 0
    %88 = vmatpush.bf16.msra.mxu0 0
    %89 = vmatpush.bf16.msra.mxu0 0
    %90 = vmatpush.bf16.msra.mxu0 0
    %91 = vmatpush.bf16.msra.mxu0 0
    %92 = vmatpush.bf16.msra.mxu0 %v65
    %93 = vmatmul.bf16.gmra.mxu0 %v70
    %v94 = vpop.f32.mrf.mxu0
    %v95 = vadd.f32 0.0, %v94
    %v96 = vpop.f32.mrf.mxu0
    %97 = vdwg.mxu0
    %v100 = vunpack.c.l.b16 %v54
    %v101 = vunpack.c.h.b16 %v54
    %v102 = vunpack.c.l.b16 %v55
    %v103 = vunpack.c.h.b16 %v55
    %v104 = vpack.c.b16 %v102, %v100
    %v105 = vpack.c.b16 %v103, %v101
    %v109 = vsel %vm68, %v51, 0
    %111 = vmatpush.bf16.msra.mxu0 0
    %112 = vmatpush.bf16.msra.mxu0 0
    %113 = vmatpush.bf16.msra.mxu0 0
    %114 = vmatpush.bf16.msra.mxu0 0
    %115 = vmatpush.bf16.msra.mxu0 0
    %116 = vmatpush.bf16.msra.mxu0 0
    %117 = vmatpush.bf16.msra.mxu0 0
    %118 = vmatpush.bf16.msra.mxu0 %v104
    %119 = vmatmul.bf16.gmra.mxu0 %v109
    %v120 = vpop.f32.mrf.mxu0
    %v121 = vadd.f32 %v82, %v120
    %v122 = vpop.f32.mrf.mxu0
    %123 = vdwg.mxu0
    %124 = vmatpush.bf16.msra.mxu0 0
    %125 = vmatpush.bf16.msra.mxu0 0
    %126 = vmatpush.bf16.msra.mxu0 0
    %127 = vmatpush.bf16.msra.mxu0 0
    %128 = vmatpush.bf16.msra.mxu0 0
    %129 = vmatpush.bf16.msra.mxu0 0
    %130 = vmatpush.bf16.msra.mxu0 0
    %131 = vmatpush.bf16.msra.mxu0 %v105
    %132 = vmatmul.bf16.gmra.mxu0 %v109
    %v133 = vpop.f32.mrf.mxu0
    %v134 = vadd.f32 %v95, %v133
    %v135 = vpop.f32.mrf.mxu0
    %136 = vdwg.mxu0
    %v137 = vld [vmem:[%s4] sm:$0x3]
    %v139 = vperm.slane %v137, 0
    %v140 = vperm.slane %v137, 1
    %v143 = vadd.f32 %v121, %v139
    %v144 = vadd.f32 %v134, %v140
    %v145 = vmax.f32 %v143, 0.0
    %v146 = vmax.f32 %v144, 0.0
    %v147 = vpack.c.bf16 %v145, %v145
    %v148 = vpack.c.bf16 %v146, %v146
    %v149 = vld [vmem:[#allocation2] sm:$0xff]
    %v150 = vld [vmem:[#allocation2 + $0x8] sm:$0xff]
    %v151 = vld [vmem:[#allocation2 + $0x10] sm:$0xff]
    %v152 = vld [vmem:[#allocation2 + $0x18] sm:$0xff]
    %v153 = vld [vmem:[#allocation2 + $0x20] sm:$0xff]
    %v154 = vld [vmem:[#allocation2 + $0x28] sm:$0xff]
    %v155 = vld [vmem:[#allocation2 + $0x30] sm:$0xff]
    %v156 = vld [vmem:[#allocation2 + $0x38] sm:$0xff]
    %v157 = vld [vmem:[#allocation2 + $0x40] sm:$0xff]
    %v158 = vld [vmem:[#allocation2 + $0x48] sm:$0xff]
    %v159 = vld [vmem:[#allocation2 + $0x50] sm:$0xff]
    %v160 = vld [vmem:[#allocation2 + $0x58] sm:$0xff]
    %v161 = vld [vmem:[#allocation2 + $0x60] sm:$0xff]
    %v162 = vld [vmem:[#allocation2 + $0x68] sm:$0xff]
    %v163 = vld [vmem:[#allocation2 + $0x70] sm:$0xff]
    %v164 = vld [vmem:[#allocation2 + $0x78] sm:$0xff]
    %v165 = vld [vmem:[#allocation2 + $0x80] sm:$0xff]
    %v166 = vld [vmem:[#allocation2 + $0x88] sm:$0xff]
    %v167 = vld [vmem:[#allocation2 + $0x90] sm:$0xff]
    %v168 = vld [vmem:[#allocation2 + $0x98] sm:$0xff]
    %v169 = vld [vmem:[#allocation2 + $0xa0] sm:$0xff]
    %v170 = vld [vmem:[#allocation2 + $0xa8] sm:$0xff]
    %v171 = vld [vmem:[#allocation2 + $0xb0] sm:$0xff]
    %v172 = vld [vmem:[#allocation2 + $0xb8] sm:$0xff]
    %v173 = vld [vmem:[#allocation2 + $0xc0] sm:$0xff]
    %v174 = vld [vmem:[#allocation2 + $0xc8] sm:$0xff]
    %v175 = vld [vmem:[#allocation2 + $0xd0] sm:$0xff]
    %v176 = vld [vmem:[#allocation2 + $0xd8] sm:$0xff]
    %v177 = vld [vmem:[#allocation2 + $0xe0] sm:$0xff]
    %v178 = vld [vmem:[#allocation2 + $0xe8] sm:$0xff]
    %v179 = vld [vmem:[#allocation2 + $0xf0] sm:$0xff]
    %v180 = vld [vmem:[#allocation2 + $0xf8] sm:$0xff]
    %v181 = vld [vmem:[%s6] sm:$0x3]
    %v183 = vperm.slane %v181, 0
    %v184 = vperm.slane %v181, 1
    %v219 = vunpack.c.l.b16 %v149
    %v220 = vunpack.c.h.b16 %v149
    %v221 = vunpack.c.l.b16 %v150
    %v222 = vunpack.c.h.b16 %v150
    %v223 = vunpack.c.l.b16 %v151
    %v224 = vunpack.c.h.b16 %v151
    %v225 = vunpack.c.l.b16 %v152
    %v226 = vunpack.c.h.b16 %v152
    %v227 = vunpack.c.l.b16 %v153
    %v228 = vunpack.c.h.b16 %v153
    %v229 = vunpack.c.l.b16 %v154
    %v230 = vunpack.c.h.b16 %v154
    %v231 = vunpack.c.l.b16 %v155
    %v232 = vunpack.c.h.b16 %v155
    %v233 = vunpack.c.l.b16 %v156
    %v234 = vunpack.c.h.b16 %v156
    %v235 = vunpack.c.l.b16 %v157
    %v236 = vunpack.c.h.b16 %v157
    %v237 = vunpack.c.l.b16 %v158
    %v238 = vunpack.c.h.b16 %v158
    %v239 = vunpack.c.l.b16 %v159
    %v240 = vunpack.c.h.b16 %v159
    %v241 = vunpack.c.l.b16 %v160
    %v242 = vunpack.c.h.b16 %v160
    %v243 = vunpack.c.l.b16 %v161
    %v244 = vunpack.c.h.b16 %v161
    %v245 = vunpack.c.l.b16 %v162
    %v246 = vunpack.c.h.b16 %v162
    %v247 = vunpack.c.l.b16 %v163
    %v248 = vunpack.c.h.b16 %v163
    %v249 = vunpack.c.l.b16 %v164
    %v250 = vunpack.c.h.b16 %v164
    %v251 = vunpack.c.l.b16 %v165
    %v252 = vunpack.c.h.b16 %v165
    %v253 = vunpack.c.l.b16 %v166
    %v254 = vunpack.c.h.b16 %v166
    %v255 = vunpack.c.l.b16 %v167
    %v256 = vunpack.c.h.b16 %v167
    %v257 = vunpack.c.l.b16 %v168
    %v258 = vunpack.c.h.b16 %v168
    %v259 = vunpack.c.l.b16 %v169
    %v260 = vunpack.c.h.b16 %v169
    %v261 = vunpack.c.l.b16 %v170
    %v262 = vunpack.c.h.b16 %v170
    %v263 = vunpack.c.l.b16 %v171
    %v264 = vunpack.c.h.b16 %v171
    %v265 = vunpack.c.l.b16 %v172
    %v266 = vunpack.c.h.b16 %v172
    %v267 = vunpack.c.l.b16 %v173
    %v268 = vunpack.c.h.b16 %v173
    %v269 = vunpack.c.l.b16 %v174
    %v270 = vunpack.c.h.b16 %v174
    %v271 = vunpack.c.l.b16 %v175
    %v272 = vunpack.c.h.b16 %v175
    %v273 = vunpack.c.l.b16 %v176
    %v274 = vunpack.c.h.b16 %v176
    %v275 = vunpack.c.l.b16 %v177
    %v276 = vunpack.c.h.b16 %v177
    %v277 = vunpack.c.l.b16 %v178
    %v278 = vunpack.c.h.b16 %v178
    %v279 = vunpack.c.l.b16 %v179
    %v280 = vunpack.c.h.b16 %v179
    %v281 = vunpack.c.l.b16 %v180
    %v282 = vunpack.c.h.b16 %v180
    %v283 = vpack.c.b16 %v221, %v219
    %v284 = vpack.c.b16 %v222, %v220
    %v285 = vpack.c.b16 %v225, %v223
    %v286 = vpack.c.b16 %v226, %v224
    %v287 = vpack.c.b16 %v229, %v227
    %v288 = vpack.c.b16 %v230, %v228
    %v289 = vpack.c.b16 %v233, %v231
    %v290 = vpack.c.b16 %v234, %v232
    %v291 = vpack.c.b16 %v237, %v235
    %v292 = vpack.c.b16 %v238, %v236
    %v293 = vpack.c.b16 %v241, %v239
    %v294 = vpack.c.b16 %v242, %v240
    %v295 = vpack.c.b16 %v245, %v243
    %v296 = vpack.c.b16 %v246, %v244
    %v297 = vpack.c.b16 %v249, %v247
    %v298 = vpack.c.b16 %v250, %v248
    %v299 = vpack.c.b16 %v253, %v251
    %v300 = vpack.c.b16 %v254, %v252
    %v301 = vpack.c.b16 %v257, %v255
    %v302 = vpack.c.b16 %v258, %v256
    %v303 = vpack.c.b16 %v261, %v259
    %v304 = vpack.c.b16 %v262, %v260
    %v305 = vpack.c.b16 %v265, %v263
    %v306 = vpack.c.b16 %v266, %v264
    %v307 = vpack.c.b16 %v269, %v267
    %v308 = vpack.c.b16 %v270, %v268
    %v309 = vpack.c.b16 %v273, %v271
    %v310 = vpack.c.b16 %v274, %v272
    %v311 = vpack.c.b16 %v277, %v275
    %v312 = vpack.c.b16 %v278, %v276
    %v313 = vpack.c.b16 %v281, %v279
    %v314 = vpack.c.b16 %v282, %v280
    %347 = vmatpush.bf16.msra.mxu0 %v297
    %348 = vmatpush.bf16.msra.mxu0 %v295
    %349 = vmatpush.bf16.msra.mxu0 %v293
    %350 = vmatpush.bf16.msra.mxu0 %v291
    %351 = vmatpush.bf16.msra.mxu0 %v289
    %352 = vmatpush.bf16.msra.mxu0 %v287
    %353 = vmatpush.bf16.msra.mxu0 %v285
    %354 = vmatpush.bf16.msra.mxu0 %v283
    %355 = vmatmul.bf16.gmra.mxu0 %v147
    %v356 = vpop.f32.mrf.mxu0
    %v357 = vadd.f32 %v183, %v356
    %v358 = vpop.f32.mrf.mxu0
    %359 = vdwg.mxu0
    %360 = vmatpush.bf16.msra.mxu0 %v313
    %361 = vmatpush.bf16.msra.mxu0 %v311
    %362 = vmatpush.bf16.msra.mxu0 %v309
    %363 = vmatpush.bf16.msra.mxu0 %v307
    %364 = vmatpush.bf16.msra.mxu0 %v305
    %365 = vmatpush.bf16.msra.mxu0 %v303
    %366 = vmatpush.bf16.msra.mxu0 %v301
    %367 = vmatpush.bf16.msra.mxu0 %v299
    %368 = vmatmul.bf16.gmra.mxu0 %v148
    %v369 = vpop.f32.mrf.mxu0
    %v370 = vadd.f32 %v357, %v369
    %v371 = vpop.f32.mrf.mxu0
    %372 = vdwg.mxu0
    %373 = vmatpush.bf16.msra.mxu0 %v298
    %374 = vmatpush.bf16.msra.mxu0 %v296
    %375 = vmatpush.bf16.msra.mxu0 %v294
    %376 = vmatpush.bf16.msra.mxu0 %v292
    %377 = vmatpush.bf16.msra.mxu0 %v290
    %378 = vmatpush.bf16.msra.mxu0 %v288
    %379 = vmatpush.bf16.msra.mxu0 %v286
    %380 = vmatpush.bf16.msra.mxu0 %v284
    %381 = vmatmul.bf16.gmra.mxu0 %v147
    %v382 = vpop.f32.mrf.mxu0
    %v383 = vadd.f32 %v184, %v382
    %v384 = vpop.f32.mrf.mxu0
    %385 = vdwg.mxu0
    %386 = vmatpush.bf16.msra.mxu0 %v314
    %387 = vmatpush.bf16.msra.mxu0 %v312
    %388 = vmatpush.bf16.msra.mxu0 %v310
    %389 = vmatpush.bf16.msra.mxu0 %v308
    %390 = vmatpush.bf16.msra.mxu0 %v306
    %391 = vmatpush.bf16.msra.mxu0 %v304
    %392 = vmatpush.bf16.msra.mxu0 %v302
    %393 = vmatpush.bf16.msra.mxu0 %v300
    %394 = vmatmul.bf16.gmra.mxu0 %v148
    %v395 = vpop.f32.mrf.mxu0
    %v396 = vadd.f32 %v383, %v395
    %v397 = vpop.f32.mrf.mxu0
    %398 = vdwg.mxu0
    %v399 = vmax.f32 %v370, 0.0
    %v400 = vmax.f32 %v396, 0.0
    %v401 = vpack.c.bf16 %v399, %v399
    %v402 = vpack.c.bf16 %v400, %v400
    %v403 = vld [vmem:[%s7] sm:$0xf]
    %v404 = vld [vmem:[%s7 + $0x4] sm:$0xf]
    %v405 = vld [vmem:[%s7 + $0x8] sm:$0xf]
    %v406 = vld [vmem:[%s7 + $0xc] sm:$0xf]
    %v407 = vld [vmem:[%s7 + $0x10] sm:$0xf]
    %v408 = vld [vmem:[%s7 + $0x14] sm:$0xf]
    %v409 = vld [vmem:[%s7 + $0x18] sm:$0xf]
    %v410 = vld [vmem:[%s7 + $0x1c] sm:$0xf]
    %v411 = vld [vmem:[%s7 + $0x20] sm:$0xf]
    %v412 = vld [vmem:[%s7 + $0x24] sm:$0xf]
    %v413 = vld [vmem:[%s7 + $0x28] sm:$0xf]
    %v414 = vld [vmem:[%s7 + $0x2c] sm:$0xf]
    %v415 = vld [vmem:[%s7 + $0x30] sm:$0xf]
    %v416 = vld [vmem:[%s7 + $0x34] sm:$0xf]
    %v417 = vld [vmem:[%s7 + $0x38] sm:$0xf]
    %v418 = vld [vmem:[%s7 + $0x3c] sm:$0xf]
    %v419 = vld [vmem:[%s7 + $0x40] sm:$0xf]
    %v420 = vld [vmem:[%s7 + $0x44] sm:$0xf]
    %v421 = vld [vmem:[%s7 + $0x48] sm:$0xf]
    %v422 = vld [vmem:[%s7 + $0x4c] sm:$0xf]
    %v423 = vld [vmem:[%s7 + $0x50] sm:$0xf]
    %v424 = vld [vmem:[%s7 + $0x54] sm:$0xf]
    %v425 = vld [vmem:[%s7 + $0x58] sm:$0xf]
    %v426 = vld [vmem:[%s7 + $0x5c] sm:$0xf]
    %v427 = vld [vmem:[%s7 + $0x60] sm:$0xf]
    %v428 = vld [vmem:[%s7 + $0x64] sm:$0xf]
    %v429 = vld [vmem:[%s7 + $0x68] sm:$0xf]
    %v430 = vld [vmem:[%s7 + $0x6c] sm:$0xf]
    %v431 = vld [vmem:[%s7 + $0x70] sm:$0xf]
    %v432 = vld [vmem:[%s7 + $0x74] sm:$0xf]
    %v433 = vld [vmem:[%s7 + $0x78] sm:$0xf]
    %v434 = vld [vmem:[%s7 + $0x7c] sm:$0xf]
    %v435 = vld [vmem:[%s8] sm:$0x1]
    %v437 = vperm.slane %v435, 0
    %v471 = vunpack.c.l.b16 %v403
    %v472 = vunpack.c.l.b16 %v404
    %v473 = vunpack.c.l.b16 %v405
    %v474 = vunpack.c.l.b16 %v406
    %v475 = vunpack.c.l.b16 %v407
    %v476 = vunpack.c.l.b16 %v408
    %v477 = vunpack.c.l.b16 %v409
    %v478 = vunpack.c.l.b16 %v410
    %v479 = vunpack.c.l.b16 %v411
    %v480 = vunpack.c.l.b16 %v412
    %v481 = vunpack.c.l.b16 %v413
    %v482 = vunpack.c.l.b16 %v414
    %v483 = vunpack.c.l.b16 %v415
    %v484 = vunpack.c.l.b16 %v416
    %v485 = vunpack.c.l.b16 %v417
    %v486 = vunpack.c.l.b16 %v418
    %v487 = vunpack.c.l.b16 %v419
    %v488 = vunpack.c.l.b16 %v420
    %v489 = vunpack.c.l.b16 %v421
    %v490 = vunpack.c.l.b16 %v422
    %v491 = vunpack.c.l.b16 %v423
    %v492 = vunpack.c.l.b16 %v424
    %v493 = vunpack.c.l.b16 %v425
    %v494 = vunpack.c.l.b16 %v426
    %v495 = vunpack.c.l.b16 %v427
    %v496 = vunpack.c.l.b16 %v428
    %v497 = vunpack.c.l.b16 %v429
    %v498 = vunpack.c.l.b16 %v430
    %v499 = vunpack.c.l.b16 %v431
    %v500 = vunpack.c.l.b16 %v432
    %v501 = vunpack.c.l.b16 %v433
    %v502 = vunpack.c.l.b16 %v434
    %v503 = vpack.c.b16 %v472, %v471
    %v504 = vpack.c.b16 %v474, %v473
    %v505 = vpack.c.b16 %v476, %v475
    %v506 = vpack.c.b16 %v478, %v477
    %v507 = vpack.c.b16 %v480, %v479
    %v508 = vpack.c.b16 %v482, %v481
    %v509 = vpack.c.b16 %v484, %v483
    %v510 = vpack.c.b16 %v486, %v485
    %v511 = vpack.c.b16 %v488, %v487
    %v512 = vpack.c.b16 %v490, %v489
    %v513 = vpack.c.b16 %v492, %v491
    %v514 = vpack.c.b16 %v494, %v493
    %v515 = vpack.c.b16 %v496, %v495
    %v516 = vpack.c.b16 %v498, %v497
    %v517 = vpack.c.b16 %v500, %v499
    %v518 = vpack.c.b16 %v502, %v501
    %535 = vmatpush.bf16.msra.mxu0 %v510
    %536 = vmatpush.bf16.msra.mxu0 %v509
    %537 = vmatpush.bf16.msra.mxu0 %v508
    %538 = vmatpush.bf16.msra.mxu0 %v507
    %539 = vmatpush.bf16.msra.mxu0 %v506
    %540 = vmatpush.bf16.msra.mxu0 %v505
    %541 = vmatpush.bf16.msra.mxu0 %v504
    %542 = vmatpush.bf16.msra.mxu0 %v503
    %543 = vmatmul.bf16.gmra.mxu0 %v401
    %v544 = vpop.f32.mrf.mxu0
    %v545 = vadd.f32 %v437, %v544
    %v546 = vpop.f32.mrf.mxu0
    %547 = vdwg.mxu0
    %548 = vmatpush.bf16.msra.mxu0 %v518
    %549 = vmatpush.bf16.msra.mxu0 %v517
    %550 = vmatpush.bf16.msra.mxu0 %v516
    %551 = vmatpush.bf16.msra.mxu0 %v515
    %552 = vmatpush.bf16.msra.mxu0 %v514
    %553 = vmatpush.bf16.msra.mxu0 %v513
    %554 = vmatpush.bf16.msra.mxu0 %v512
    %555 = vmatpush.bf16.msra.mxu0 %v511
    %556 = vmatmul.bf16.gmra.mxu0 %v402
    %v557 = vpop.f32.mrf.mxu0
    %v558 = vadd.f32 %v545, %v557
    %v559 = vpop.f32.mrf.mxu0
    %560 = vdwg.mxu0
    %v561 = vlaneseq
    %v562 = vand.u32 %v561, 127
    %v563 = vmax.f32 %v558, -20.0
    %v564 = vmin.f32 %v563, 2.0
    %v565 = vmul.f32 %v564, 1.442695
    %v566 = vpow.pop %v565
    %vm567 = vcmp.lt.s32.totalorder %v562, 8
    %v568 = vsel %vm567, %v558, %v566
    %vm569 = vcmask 123904
    %570 = vst.msk [vmem:[#allocation5] sm:$0x3] %vm569, %v568
    // Predicated region
    $region42: #{tpu_custom_call.1} parent=1 // pred_check
      _
    $region43: #{tpu_custom_call.1} parent=1 // pred_check_branch
      %572 = sbr.rel (0) target = $region45
    $region44: #{tpu_custom_call.1} parent=1 // pred_region
      %574 = vsyncadd [#allocation4], 0
      %s576 = sshll.u32 [#allocation5], 4
      %s577 = int_to_ptr.vmem [resolvable:$true] %s576
      %s578 = sshll.u32 %s9, 4
      %s579 = int_to_ptr.hbm [resolvable:$true] %s578
      %581 = dma.vmem_to_hbm [thread:$0]  %s577, 32, %s579, [#allocation4]
    $region45: #{tpu_custom_call.1} parent=1 // pred_fallthru
      _
    // Predicated region
    $region46: #{tpu_custom_call.1} parent=1 // pred_check
      _
    $region47: #{tpu_custom_call.1} parent=1 // pred_check_branch
      %583 = sbr.rel (0) target = $region49
    $region48: #{tpu_custom_call.1} parent=1 // pred_region
      %585 = dma.done [#allocation4], 32
    $region49: #{tpu_custom_call.1} parent=1 // pred_fallthru
      _
    %586 = vsyncpa [#allocation3], 1
    %587 = vsyncpa [#allocation4], 1

</llo_original>
